<compile_context>
chip_gen: v7x
topology: tpu7x:2x2x1
jax: 0.10.0
libtpu: 0.0.40
codegen_flags: <defaults>
</compile_context>

<pallas_src>
import functools
import math

import jax
import jax.numpy as jnp
from jax.experimental import pallas as pl
from jax.experimental.pallas import tpu as pltpu


def _round_up(v: int, m: int) -> int:
    return (v + m - 1) // m * m


def _chip_config():
    """Per-generation tile-size / VMEM-cap / TensorCore-count tuning."""
    try:
        kind = jax.devices()[0].device_kind.lower()
    except Exception:  # pragma: no cover - defensive
        kind = ""
    if "v5" in kind:
        # 1 TC, ~0.8 TB/s HBM: 2 MiB tiles already hide per-step overhead.
        return dict(target_bytes=2 << 20, vmem_cap=96 << 20, num_tc=1)
    if "v6" in kind:
        # 1 TC, ~1.4 TB/s HBM, 128 MiB physical VMEM.
        return dict(target_bytes=4 << 20, vmem_cap=96 << 20, num_tc=1)
    if "v7" in kind:
        # 2 TCs, ~3.2 TB/s HBM, only 64 MiB physical VMEM: bigger tiles to cut
        # per-step overhead, but keep the scoped limit well under physical so
        # Mosaic retains scratch headroom.
        return dict(target_bytes=5 << 20, vmem_cap=56 << 20, num_tc=2)
    # Unknown / future chip: conservative middle ground.
    return dict(target_bytes=4 << 20, vmem_cap=48 << 20, num_tc=2)


# ----------------------------------------------------------------------------
# Kernel bodies
# ----------------------------------------------------------------------------

def _pow_tile(x, power):
    if power == 2:
        return x * x                      # plain VPU multiply
    if isinstance(power, int):
        return jax.lax.integer_pow(x, power)   # VPU multiplies, not exp/log
    return jnp.power(x, power)


def _inv_norm(s, power):
    # s: per-row p-sums (tiny, per-row only -> EUP/VPU cost negligible).
    if power == 2:
        return jax.lax.rsqrt(s)
    return jnp.power(s, -1.0 / power)     # (sum)^(1/p) and reciprocal folded


def _lane_norm_kernel(x_ref, o_ref, *, power):
    # x_ref / o_ref: (block_n, D); L_p-normalize each row along the lane axis.
    xf = x_ref[...].astype(jnp.float32)
    s = jnp.sum(_pow_tile(xf, power), axis=-1, keepdims=True)
    inv = _inv_norm(s, power)
    # Epilogue multiply in the input dtype (bf16 stays packed); re-read x_ref
    # so the f32 copy is not live across both reduction and scale.
    o_ref[...] = (x_ref[...] * inv.astype(x_ref.dtype)).astype(o_ref.dtype)


def _packed_lane_norm_kernel(x_ref, o_ref, *, power, seg, nseg):
    # x_ref / o_ref: (block_n, nseg*seg).  Each 128-lane row packs `nseg`
    # independent logical rows of width `seg`.  Segmented p-sum and the
    # per-segment broadcast go through tiny block-diagonal matmuls (MXU slot,
    # free under the DMA roofline).  HIGHEST precision keeps f32 accuracy.
    w = seg * nseg
    xf = x_ref[...].astype(jnp.float32)
    sel = (jax.lax.broadcasted_iota(jnp.int32, (w, nseg), 0) // seg
           == jax.lax.broadcasted_iota(jnp.int32, (w, nseg), 1)
           ).astype(jnp.float32)                                  # (w, nseg)
    s = jnp.dot(_pow_tile(xf, power), sel,
                precision=jax.lax.Precision.HIGHEST,
                preferred_element_type=jnp.float32)               # (bn, nseg)
    inv = _inv_norm(s, power)
    sel_t = (jax.lax.broadcasted_iota(jnp.int32, (nseg, w), 1) // seg
             == jax.lax.broadcasted_iota(jnp.int32, (nseg, w), 0)
             ).astype(jnp.float32)                                # (nseg, w)
    inv_full = jnp.dot(inv, sel_t,
                       precision=jax.lax.Precision.HIGHEST,
                       preferred_element_type=jnp.float32)        # (bn, w)
    o_ref[...] = (x_ref[...] * inv_full.astype(x_ref.dtype)).astype(o_ref.dtype)


def _channel_norm_kernel(x_ref, o_ref, *, power):
    # x_ref / o_ref: (bb, C, tile_m); L_p-normalize over the channel (sublane)
    # axis while H*W stays dense on the lane axis.
    xf = x_ref[...].astype(jnp.float32)
    s = jnp.sum(_pow_tile(xf, power), axis=1, keepdims=True)
    inv = _inv_norm(s, power)
    o_ref[...] = (x_ref[...] * inv.astype(x_ref.dtype)).astype(o_ref.dtype)


# ----------------------------------------------------------------------------
# Tiling heuristics
# ----------------------------------------------------------------------------

def _choose_rows(n_rows, row_bytes, row_align, cfg):
    """Rows per block: ~target bytes per VMEM buffer, row_align-aligned.

    Only multi-TensorCore chips (v7x) force a >= 2-step grid so both cores get
    a share; single-TC chips keep the single-block fast path.
    """
    bn = (cfg["target_bytes"] // max(1, row_bytes)) // row_align * row_align
    bn = max(row_align, bn)
    if bn >= n_rows:
        bn = n_rows                         # one full block, no masking at all
        if cfg["num_tc"] >= 2 and n_rows >= 2 * row_align:
            bn = _round_up(pl.cdiv(n_rows, 2), row_align)
    return bn


def _vmem_limit_bytes(tile_in_bytes, tile_elems, cfg):
    # 2x double-buffered input + 2x output tiles, one live f32 temporary for
    # the reduction, plus compiler scratch headroom; capped per generation.
    needed = 4 * tile_in_bytes + 2 * tile_elems * 4 + (4 << 20)
    return int(min(cfg["vmem_cap"], max(32 << 20, needed)))


# ----------------------------------------------------------------------------
# pallas_call wrappers
# ----------------------------------------------------------------------------

def _normalize_rows_2d(x, power, cfg):
    """(N, D): reduce along D (the lane axis).  No host padding / slicing."""
    N, D = x.shape
    itemsize = jnp.dtype(x.dtype).itemsize
    row_align = max(8, 32 // max(1, itemsize))      # keep packed sublanes dense
    bn = _choose_rows(N, D * itemsize, row_align, cfg)
    grid_n = pl.cdiv(N, bn)
    # TODO(synk): very wide D (a single row_align-row slab of several MiB)
    # needs a D-tiled two-pass variant (accumulate the p-sum over D chunks,
    # then scale); v7x's 64 MiB VMEM hits that limit first.
    tile_elems = bn * D
    return pl.pallas_call(
        functools.partial(_lane_norm_kernel, power=power),
        out_shape=jax.ShapeDtypeStruct((N, D), x.dtype),
        grid_spec=pltpu.PrefetchScalarGridSpec(
            num_scalar_prefetch=0,
            grid=(grid_n,),
            in_specs=[pl.BlockSpec((bn, D), lambda i: (i, 0))],
            out_specs=pl.BlockSpec((bn, D), lambda i: (i, 0)),
        ),
        compiler_params=pltpu.CompilerParams(
            dimension_semantics=("parallel",),
            vmem_limit_bytes=_vmem_limit_bytes(tile_elems * itemsize,
                                               tile_elems, cfg),
        ),
    )(x)


def _normalize_rows_packed(x, power, cfg, seg, nseg):
    """Lane-dense path for narrow D: pack `nseg` logical rows of width `seg`
    into each 128-lane physical row (free contiguous reshape)."""
    N, D = x.shape
    xp = x.reshape(N // nseg, nseg * seg)           # free: row-major contiguous
    n_rows, w = xp.shape
    itemsize = jnp.dtype(x.dtype).itemsize
    row_align = max(8, 32 // max(1, itemsize))
    bn = _choose_rows(n_rows, w * itemsize, row_align, cfg)
    grid_n = pl.cdiv(n_rows, bn)
    tile_elems = bn * w
    out = pl.pallas_call(
        functools.partial(_packed_lane_norm_kernel, power=power,
                          seg=seg, nseg=nseg),
        out_shape=jax.ShapeDtypeStruct((n_rows, w), x.dtype),
        grid_spec=pltpu.PrefetchScalarGridSpec(
            num_scalar_prefetch=0,
            grid=(grid_n,),
            in_specs=[pl.BlockSpec((bn, w), lambda i: (i, 0))],
            out_specs=pl.BlockSpec((bn, w), lambda i: (i, 0)),
        ),
        compiler_params=pltpu.CompilerParams(
            dimension_semantics=("parallel",),
            vmem_limit_bytes=_vmem_limit_bytes(tile_elems * itemsize,
                                               tile_elems, cfg),
        ),
    )(xp)
    return out.reshape(N, D)


def _normalize_channels_3d(x3, power, cfg):
    """(B, C, M): reduce along C (axis 1) with C on sublanes, M on lanes.
    Avoids the two full-HBM transposes a moveaxis-to-last-dim wrapper costs."""
    B, C, M = x3.shape
    itemsize = jnp.dtype(x3.dtype).itemsize
    target = cfg["target_bytes"]

    if M % 128 == 0 and C * M * itemsize > target:
        # Lane axis is 128-aligned and one batch slab is too big: tile M.
        tm = max(128, (target // max(1, C * itemsize)) // 128 * 128)
        tm = min(tm, M)
        bb = 1
    else:
        # Keep M as one full block (required when M is not 128-aligned) and
        # put as many batch elements per block as the budget allows.
        tm = M
        bb = min(B, max(1, target // max(1, C * M * itemsize)))
    grid_b = pl.cdiv(B, bb)
    grid_m = pl.cdiv(M, tm)

    # Keep both TensorCores busy on multi-TC chips when one block covers all.
    if cfg["num_tc"] >= 2 and grid_b * grid_m == 1 and B > 1:
        bb = pl.cdiv(B, 2)
        grid_b = pl.cdiv(B, bb)

    # TODO(synk): a huge channel count with an unaligned M would need a
    # C-tiled two-pass variant; not needed for typical feature-map shapes.
    tile_elems = bb * C * tm
    return pl.pallas_call(
        functools.partial(_channel_norm_kernel, power=power),
        out_shape=jax.ShapeDtypeStruct((B, C, M), x3.dtype),
        grid_spec=pltpu.PrefetchScalarGridSpec(
            num_scalar_prefetch=0,
            grid=(grid_b, grid_m),
            in_specs=[pl.BlockSpec((bb, C, tm), lambda i, j: (i, 0, j))],
            out_specs=pl.BlockSpec((bb, C, tm), lambda i, j: (i, 0, j)),
        ),
        compiler_params=pltpu.CompilerParams(
            dimension_semantics=("parallel", "parallel"),
            vmem_limit_bytes=_vmem_limit_bytes(tile_elems * itemsize,
                                               tile_elems, cfg),
        ),
    )(x3)


def normalize(x: jax.Array, power=2) -> jax.Array:
    """Pallas equivalent of the PyTorch `Normalize` module (reduce over dim 1).

    Matches the module literally: no eps clamp and no |x|, so an all-zero row
    gives inf/NaN and odd p with negative entries can NaN, exactly like the
    reference `x.pow(p).sum(1).pow(1/p)` formulation.
    """
    assert x.ndim >= 2, "Normalize reduces over dim 1; need ndim >= 2"
    cfg = _chip_config()
    if x.ndim == 2:
        N, D = x.shape
        if D < 128 and 128 % D == 0 and (128 // D) > 1 and N % (128 // D) == 0:
            return _normalize_rows_packed(x, power, cfg, seg=D, nseg=128 // D)
        return _normalize_rows_2d(x, power, cfg)
    B, C = x.shape[0], x.shape[1]
    M = int(math.prod(x.shape[2:]))
    out3 = _normalize_channels_3d(x.reshape(B, C, M), power, cfg)
    return out3.reshape(x.shape)


def normalize_ref(x: jax.Array, power=2) -> jax.Array:
    # Pure-JAX reference mirroring the PyTorch module exactly.
    norm = jnp.power(jnp.sum(jnp.power(x, power), axis=1, keepdims=True),
                     1.0 / power)
    return x / norm


if __name__ == "__main__":
    key = jax.random.PRNGKey(0)
    k1, k2, k3, k4, k5, k6, k7 = jax.random.split(key, 7)

    # NCHW feature map (the spec's typical input): reduce over channels (dim 1)
    # without any moveaxis transposes.
    x0 = jax.random.normal(k1, (2, 4, 16, 16), dtype=jnp.float32)
    o0 = jax.block_until_ready(normalize(x0, power=2))
    r0 = normalize_ref(x0, power=2)
    assert o0.shape == x0.shape and o0.dtype == x0.dtype
    assert jnp.allclose(o0, r0, atol=1e-5, rtol=1e-5), "mismatch (2,4,16,16)"

    # (N, D) embeddings with a lane-aligned feature dim.
    x1 = jax.random.normal(k2, (8, 128), dtype=jnp.float32)
    o1 = jax.block_until_ready(normalize(x1, power=2))
    assert jnp.allclose(o1, normalize_ref(x1), atol=1e-5, rtol=1e-5), "mismatch (8,128)"

    # Ragged N, narrow D, N not a multiple of the packing factor: plain row
    # path with the full-D block and no host padding / slicing.
    x2 = jax.random.normal(k3, (13, 32), dtype=jnp.float32)
    o2 = jax.block_until_ready(normalize(x2, power=2))
    assert jnp.allclose(o2, normalize_ref(x2), atol=1e-5, rtol=1e-5), "mismatch (13,32)"

    # Narrow D with N % (128//D) == 0: lane-dense packed path (MXU segmented sum).
    x3 = jax.random.normal(k4, (16, 32), dtype=jnp.float32)
    o3 = jax.block_until_ready(normalize(x3, power=2))
    assert jnp.allclose(o3, normalize_ref(x3), atol=1e-4, rtol=1e-4), "mismatch packed (16,32)"

    # bf16 NCHW: f32 reduction, bf16 epilogue multiply.
    x4 = jax.random.normal(k5, (2, 4, 16, 16), dtype=jnp.bfloat16)
    o4 = jax.block_until_ready(normalize(x4, power=2))
    r4 = normalize_ref(x4.astype(jnp.float32))
    assert o4.dtype == jnp.bfloat16
    assert jnp.allclose(o4.astype(jnp.float32), r4, atol=3e-2, rtol=3e-2), "mismatch bf16"

    # General integer power, ragged D (positive inputs so the literal reference
    # stays finite).
    x5 = jnp.abs(jax.random.normal(k6, (8, 160), dtype=jnp.float32)) + 0.1
    o5 = jax.block_until_ready(normalize(x5, power=3))
    assert jnp.allclose(o5, normalize_ref(x5, power=3), atol=1e-5, rtol=1e-5), "mismatch p=3"

    # General power through the packed path.
    x6 = jnp.abs(jax.random.normal(k7, (8, 32), dtype=jnp.float32)) + 0.1
    o6 = jax.block_until_ready(normalize(x6, power=3))
    assert jnp.allclose(o6, normalize_ref(x6, power=3), atol=1e-4, rtol=1e-4), "mismatch packed p=3"

    print("KERNEL_OK")
</pallas_src>

<mosaic_0001>
module attributes {stable_mosaic.version = 11 : i64} {
  func.func @_channel_norm_kernel(%arg0: i32, %arg1: i32, %arg2: memref<1x4x256xf32, #tpu.memory_space<vmem>>, %arg3: memref<1x4x256xf32, #tpu.memory_space<vmem>>) attributes {dimension_semantics = [#tpu.dimension_semantics<parallel>, #tpu.dimension_semantics<parallel>], iteration_bounds = array<i64: 2, 1>, scalar_prefetch = 0 : i64, scratch_operands = 0 : i64, tpu.core_type = #tpu.core_type<tc>, window_params = [{transform_indices = @transform_0, window_bounds = array<i64: 1, 4, 256>}, {transform_indices = @transform_1, window_bounds = array<i64: 1, 4, 256>}]} {
    %c0 = arith.constant 0 : index
    %c0_0 = arith.constant 0 : index
    %c0_1 = arith.constant 0 : index
    %0 = vector.load %arg2[%c0, %c0_0, %c0_1] : memref<1x4x256xf32, #tpu.memory_space<vmem>>, vector<1x4x256xf32>
    %1 = arith.mulf %0, %0 : vector<1x4x256xf32>
    %cst = arith.constant dense<0.000000e+00> : vector<1x256xf32>
    %2 = vector.multi_reduction <add>, %1, %cst [1] : vector<1x4x256xf32> to vector<1x256xf32>
    %3 = vector.shape_cast %2 : vector<1x256xf32> to vector<1x1x256xf32>
    %4 = math.rsqrt %3 : vector<1x1x256xf32>
    %c0_2 = arith.constant 0 : index
    %c0_3 = arith.constant 0 : index
    %c0_4 = arith.constant 0 : index
    %5 = vector.load %arg2[%c0_2, %c0_3, %c0_4] : memref<1x4x256xf32, #tpu.memory_space<vmem>>, vector<1x4x256xf32>
    %6 = vector.broadcast %4 : vector<1x1x256xf32> to vector<1x4x256xf32>
    %7 = arith.mulf %5, %6 : vector<1x4x256xf32>
    %c0_5 = arith.constant 0 : index
    %c0_6 = arith.constant 0 : index
    %c0_7 = arith.constant 0 : index
    %8 = vector.load %arg3[%c0_5, %c0_6, %c0_7] : memref<1x4x256xf32, #tpu.memory_space<vmem>>, vector<1x4x256xf32>
    tpu.vector_store %arg3[%c0_5, %c0_6, %c0_7], %7 {strides = array<i32>} : memref<1x4x256xf32, #tpu.memory_space<vmem>>, vector<1x4x256xf32>,
    return
  }
  func.func @transform_0(%arg0: i32, %arg1: i32) -> (i32, i32, i32) {
    %c0_i32 = arith.constant 0 : i32
    %c0_i32_0 = arith.constant 0 : i32
    return %arg0, %c0_i32, %arg1 : i32, i32, i32
  }
  func.func @transform_1(%arg0: i32, %arg1: i32) -> (i32, i32, i32) {
    %c0_i32 = arith.constant 0 : i32
    %c0_i32_0 = arith.constant 0 : i32
    return %arg0, %c0_i32, %arg1 : i32, i32, i32
  }
}

</mosaic_0001>

<llo_original>
// kernel: tpu_custom_call.1
$region0: #{tpu_custom_call.1}
  #allocation0 [shape = 'u32[]', space=smem, size = 0x4, offset = 0x4, fixed_abs, tag = 'smem constant byte address 0x4 - core index']
  #allocation1 [shape = 'u32[144,128]{1,0:T(1,128)}', space=vmem, size = 0x12000, scoped, tag = 'internal scratch']
  %s0 = inlined_call_operand.hbm [shape: f32[2,4,256], index: 0, kind: input, shape index: {}]
  %s1 = inlined_call_operand.hbm [shape: f32[2,4,256], index: 1, kind: output, shape index: {}]
  %s2 = sld [smem:[#allocation0]]
  $region41: #{tpu_custom_call.1} parent=0
    _
  %s4 = ssub.s32 1, %s2
  %s5 = scalar_select 0, %s4, %s2
  $region1: #{tpu_custom_call.1} parent=0
    #allocation2 [shape = 'u8[8192]{0}', space=vmem, size = 0x2000, scoped, tag = 'input window, operand 0']
    #allocation3 [shape = 's32[2]{0}', space=sflag, size = 0x8, scoped, tag = 'scoped memory for tpu_custom_call.1']
    #allocation4 [shape = 's32[2]{0}', space=sflag, size = 0x8, scoped, tag = 'scoped memory for tpu_custom_call.1']
    #allocation5 [shape = 'u8[8192]{0}', space=vmem, size = 0x2000, scoped, tag = 'output window, operand 0']
    %6 = vsyncpa [#allocation3], 0
    %s7 = scalar_lea.sflag [#allocation3], 1
    %8 = vsyncpa %s7, 0
    %9 = vsyncpa [#allocation4], 0
    %s10 = scalar_lea.sflag [#allocation4], 1
    %11 = vsyncpa %s10, 0
    loop: start=0, step=1, limit=4
    $region2: #{tpu_custom_call.1} parent=1 // loop_pre_header
      _
    $region3: #{tpu_custom_call.1} parent=1 // loop_header
      %s13 = sphi 0, %s17
      %p14 = scmp.ge.s32.totalorder %s13, 4
      %s20 = sphi 0, %s32
      %s21 = sphi 0, %s28
      %s22 = sphi 0, %s20
      %s23 = sphi 0, %s21
      %s24 = sphi 0, %s22
      %s25 = sphi 0, %s23
      %s37 = sphi 0, %s39
      %s40 = sphi 0, %s37
      %s41 = sphi 0, %s40
      %s57 = sphi 0, %s41
      %s65 = sphi 0, %s67
      %s68 = sphi 0, %s65
      %s69 = sphi 0, %s68
      %s85 = sphi 0, %s69
    $region4: #{tpu_custom_call.1} parent=1 // loop_header_branch
      %16 = sbr.rel (%p14) target = $region8
    $region5: #{tpu_custom_call.1} parent=1 // loop_body
      %s18 = ssub.s32 %s13, 1
      %s19 = ssub.s32 %s13, 2
      %s26 = sadd.s32 1, %s21
      %p27 = scmp.ge.s32.totalorder %s26, 1
      %s28 = scalar_select %p27, 0, %s26
      %s29 = sadd.s32 1, %s20
      %s30 = scalar_select %p27, %s29, %s20
      %p31 = scmp.ge.s32.totalorder %s30, 2
      %s32 = scalar_select %p31, 0, %s30
      %s33 = ssub.s32 %s20, %s32
      %s34 = ssub.s32 %s21, %s28
      %s35 = sor.u32 %s33, %s34
      %p36 = scmp.eq.s32.totalorder %s35, 0
      %s38 = sadd.s32 %s37, 1
      %s39 = scalar_select %p36, %s37, %s38
      %p42 = pneg %p36
      %p43 = scmp.eq.s32.totalorder %s13, 1
      %p44 = por %p42, %p43
      %p45 = scmp.ne.s32.totalorder %s37, %s40
      %p46 = scmp.eq.s32.totalorder %s13, 0
      %p47 = por %p45, %p46
      %p48 = scmp.ne.s32.totalorder %s37, %s40
      %p49 = scmp.eq.s32.totalorder %s18, 1
      %p50 = por %p48, %p49
      %p51 = scmp.ne.s32.totalorder %s40, %s41
      %p52 = scmp.eq.s32.totalorder %s18, 0
      %p53 = por %p51, %p52
      %p54 = scmp.ne.s32.totalorder %s40, %s41
      %p55 = scmp.eq.s32.totalorder %s19, 1
      %p56 = por %p54, %p55
      %p58 = scmp.ne.s32.totalorder %s41, %s57
      %p59 = scmp.eq.s32.totalorder %s19, 0
      %p60 = por %p58, %p59
      %s61 = ssub.s32 %s20, %s32
      %s62 = ssub.s32 %s21, %s28
      %s63 = sor.u32 %s61, %s62
      %p64 = scmp.eq.s32.totalorder %s63, 0
      %s66 = sadd.s32 %s65, 1
      %s67 = scalar_select %p64, %s65, %s66
      %p70 = pneg %p64
      %p71 = scmp.eq.s32.totalorder %s13, 1
      %p72 = por %p70, %p71
      %p73 = scmp.ne.s32.totalorder %s65, %s68
      %p74 = scmp.eq.s32.totalorder %s13, 0
      %p75 = por %p73, %p74
      %p76 = scmp.ne.s32.totalorder %s65, %s68
      %p77 = scmp.eq.s32.totalorder %s18, 1
      %p78 = por %p76, %p77
      %p79 = scmp.ne.s32.totalorder %s68, %s69
      %p80 = scmp.eq.s32.totalorder %s18, 0
      %p81 = por %p79, %p80
      %p82 = scmp.ne.s32.totalorder %s68, %s69
      %p83 = scmp.eq.s32.totalorder %s19, 1
      %p84 = por %p82, %p83
      %p86 = scmp.ne.s32.totalorder %s69, %s85
      %p87 = scmp.eq.s32.totalorder %s19, 0
      %p88 = por %p86, %p87
      %p89 = scmp.le.s32.totalorder 1, %s13
      %p90 = scmp.lt.s32.totalorder %s13, 3
      %p91 = pnand %p89, %p90
      %p92 = pneg %p91
      // Predicated region
      $region9: #{tpu_custom_call.1} parent=5 // pred_check
        _
      $region10: #{tpu_custom_call.1} parent=5 // pred_check_branch
        %94 = sbr.rel (%p91) target = $region12
      $region11: #{tpu_custom_call.1} parent=5 // pred_region
        %s95 = ssub.s32 %s13, 1
      $region12: #{tpu_custom_call.1} parent=5 // pred_fallthru
        _
      %p96 = scmp.lt.s32.totalorder %s13, 2
      // Predicated region
      $region13: #{tpu_custom_call.1} parent=5 // pred_check
        %p97 = pneg %p96
      $region14: #{tpu_custom_call.1} parent=5 // pred_check_branch
        %99 = sbr.rel (%p97) target = $region16
      $region15: #{tpu_custom_call.1} parent=5 // pred_region
        // Predicated region
        $region17: #{tpu_custom_call.1} parent=15 // pred_check
          %p100 = pneg %p47
        $region18: #{tpu_custom_call.1} parent=15 // pred_check_branch
          %102 = sbr.rel (%p100) target = $region20
        $region19: #{tpu_custom_call.1} parent=15 // pred_region
          %s103 = sand.u32 %s37, 1
          %s104 = scalar_lea.sflag [#allocation3], %s103
          %s105 = sand.u32 %s37, 1
          %s106 = smul.addr %s105, 8
          %s107 = scalar_lea.vmem [#allocation2], %s106
          %s108 = smul.u32 2, %s21
          %s110 = ssub.s32 128, 128
          %111 = vsyncadd %s104, %s110
          %s112 = smul.addr %s20, 2
          %s113 = sadd.s32 %s108, %s112
          %s114 = smul.addr %s113, 64
          %s115 = scalar_lea.hbm %s0, %s114
          %s117 = sshll.u32 %s107, 4
          %s118 = int_to_ptr.vmem [resolvable:$true] %s117
          %120 = dma.hbm_to_vmem [thread:$0]  %s115, 128, %s118, %s104
        $region20: #{tpu_custom_call.1} parent=15 // pred_fallthru
          _
      $region16: #{tpu_custom_call.1} parent=5 // pred_fallthru
        _
      %p121 = scmp.le.s32.totalorder 1, %s13
      %p122 = scmp.lt.s32.totalorder %s13, 3
      %p123 = pnand %p121, %p122
      %p124 = pneg %p123
      // Predicated region
      $region21: #{tpu_custom_call.1} parent=5 // pred_check
        _
      $region22: #{tpu_custom_call.1} parent=5 // pred_check_branch
        %126 = sbr.rel (%p123) target = $region24
      $region23: #{tpu_custom_call.1} parent=5 // pred_region
        %s127 = ssub.s32 %s13, 1
        %s128 = sand.u32 %s40, 1
        %s129 = scalar_lea.sflag [#allocation3], %s128
        %s130 = sand.u32 %s40, 1
        %s131 = smul.addr %s130, 8
        %s132 = scalar_lea.vmem [#allocation2], %s131
        // Predicated region
        $region25: #{tpu_custom_call.1} parent=23 // pred_check
          %p133 = pneg %p53
        $region26: #{tpu_custom_call.1} parent=23 // pred_check_branch
          %135 = sbr.rel (%p133) target = $region28
        $region27: #{tpu_custom_call.1} parent=23 // pred_region
          %136 = dma.done %s129, 128
        $region28: #{tpu_custom_call.1} parent=23 // pred_fallthru
          _
        %s137 = sand.u32 %s40, 1
        %s138 = scalar_lea.sflag [#allocation3], %s137
        %s139 = sand.u32 %s40, 1
        %s140 = smul.addr %s139, 8
        %s141 = scalar_lea.vmem [#allocation2], %s140
        %p142 = pneg %p53
        %p143 = pneg %p50
        %p144 = pneg %p81
        %p145 = pneg %p78
        %s146 = sand.u32 %s68, 1
        %s147 = scalar_lea.sflag [#allocation4], %s146
        %s148 = sand.u32 %s68, 1
        %s149 = smul.addr %s148, 8
        %s150 = scalar_lea.vmem [#allocation5], %s149
        %s151 = smul.u32 2, %s23
        %s152 = smul.u32 2, %s23
        %v153 = vld [vmem:[%s132] sm:$0xff]
        %v154 = vmul.f32 %v153, %v153
        %v156 = vcombine.high %v154, %v154
        %vm158 = vcmask 1043456
        %v159 = vsel %vm158, %v154, 0.0
        %v160 = vrot.slane %v159, 4
        %v161 = vadd.f32 %v159, %v160
        %v162 = vrot.slane %v161, 2
        %v163 = vadd.f32 %v161, %v162
        %v164 = vrot.slane %v163, 1
        %v165 = vadd.f32 %v163, %v164
        %v166 = vsel %vm158, %v156, 0.0
        %v167 = vrot.slane %v166, 4
        %v168 = vadd.f32 %v166, %v167
        %v169 = vrot.slane %v168, 2
        %v170 = vadd.f32 %v168, %v169
        %v171 = vrot.slane %v170, 1
        %v172 = vadd.f32 %v170, %v171
        %v173 = vrsqrt.pop %v165
        %v174 = vrsqrt.pop %v172
        %v177 = vcombine.low %v173, %v174
        %v179 = vmul.f32 %v153, %v177
        %180 = vst [vmem:[%s150] sm:$0xff] %v179
        %s181 = sand.u32 %s68, 1
        %s182 = scalar_lea.sflag [#allocation4], %s181
        %s183 = sand.u32 %s68, 1
        %s184 = smul.addr %s183, 8
        %s185 = scalar_lea.vmem [#allocation5], %s184
        // Predicated region
        $region29: #{tpu_custom_call.1} parent=23 // pred_check
          %p186 = pneg %p78
        $region30: #{tpu_custom_call.1} parent=23 // pred_check_branch
          %188 = sbr.rel (%p186) target = $region32
        $region31: #{tpu_custom_call.1} parent=23 // pred_region
          %s189 = smul.u32 2, %s23
          %s191 = ssub.s32 128, 128
          %192 = vsyncadd %s182, %s191
          %s193 = smul.addr %s22, 2
          %s194 = sadd.s32 %s189, %s193
          %s195 = smul.addr %s194, 64
          %s196 = scalar_lea.hbm %s1, %s195
          %s198 = sshll.u32 %s185, 4
          %s199 = int_to_ptr.vmem [resolvable:$true] %s198
          %201 = dma.vmem_to_hbm [thread:$0]  %s199, 128, %s196, %s182
        $region32: #{tpu_custom_call.1} parent=23 // pred_fallthru
          _
      $region24: #{tpu_custom_call.1} parent=5 // pred_fallthru
        _
      %p202 = scmp.le.s32.totalorder 2, %s13
      // Predicated region
      $region33: #{tpu_custom_call.1} parent=5 // pred_check
        %p203 = pneg %p202
      $region34: #{tpu_custom_call.1} parent=5 // pred_check_branch
        %205 = sbr.rel (%p203) target = $region36
      $region35: #{tpu_custom_call.1} parent=5 // pred_region
        %s206 = ssub.s32 %s13, 2
        // Predicated region
        $region37: #{tpu_custom_call.1} parent=35 // pred_check
          %p207 = pneg %p84
        $region38: #{tpu_custom_call.1} parent=35 // pred_check_branch
          %209 = sbr.rel (%p207) target = $region40
        $region39: #{tpu_custom_call.1} parent=35 // pred_region
          %s210 = sand.u32 %s69, 1
          %s211 = scalar_lea.sflag [#allocation4], %s210
          %s212 = sand.u32 %s69, 1
          %s213 = smul.addr %s212, 8
          %s214 = scalar_lea.vmem [#allocation5], %s213
          %215 = dma.done %s211, 128
        $region40: #{tpu_custom_call.1} parent=35 // pred_fallthru
          _
      $region36: #{tpu_custom_call.1} parent=5 // pred_fallthru
        _
    $region6: #{tpu_custom_call.1} parent=1 // loop_footer
      %s17 = sadd.s32 1, %s13
    $region7: #{tpu_custom_call.1} parent=1 // loop_footer_branch
      %12 = sbr.rel target = $region3
    $region8: #{tpu_custom_call.1} parent=1 // loop_exit
      _
    %216 = vsyncpa [#allocation3], 1
    %s217 = scalar_lea.sflag [#allocation3], 1
    %218 = vsyncpa %s217, 1
    %219 = vsyncpa [#allocation4], 1
    %s220 = scalar_lea.sflag [#allocation4], 1
    %221 = vsyncpa %s220, 1

</llo_original>
